<compile_context>
chip_gen: v5e
topology: v5e:2x2
jax: 0.10.0
libtpu: 0.0.40
codegen_flags: <defaults>
</compile_context>

<pallas_src>
import functools

import numpy as np
import jax
import jax.numpy as jnp
from jax.experimental import pallas as pl
from jax.experimental.pallas import tpu as pltpu


def _round_up(x, m):
    return ((x + m - 1) // m) * m


def _pick_tile(dim_pad, prefer):
    """Largest multiple of 128 <= prefer that divides dim_pad (dim_pad % 128 == 0)."""
    t = min(prefer, dim_pad)
    t = max((t // 128) * 128, 128)
    while dim_pad % t:
        t -= 128
    return t


def _vmem_limit_bytes():
    """Per-generation VMEM budget: ~3/4 of physical, capped at 96 MiB,
    falling back to a safe 32 MiB if the query is unavailable."""
    default = 32 * 1024 * 1024
    try:
        cap = int(pltpu.get_tpu_info().vmem_capacity_bytes)
        return max(default, min(96 * 1024 * 1024, (cap * 3) // 4))
    except Exception:
        return default


_VMEM_LIMIT = _vmem_limit_bytes()


# ---------------------------------------------------------------------------
# Pallas kernels: dense layer  y = x @ W + b  (bf16 operands, f32 accumulate).
# ---------------------------------------------------------------------------
def _dense_resident_kernel(x_ref, w_ref, b_ref, o_ref):
    # Whole K and N live in one block; W/bias have constant index_maps so they
    # are DMA'd from HBM exactly once and stay resident in VMEM for the whole
    # grid.  No accumulator scratch, no pl.when: single MXU pass + epilogue.
    o_ref[...] = (
        jnp.dot(x_ref[...], w_ref[...], preferred_element_type=jnp.float32)
        + b_ref[...]
    ).astype(o_ref.dtype)


def _dense_acc_kernel(x_ref, w_ref, b_ref, o_ref, acc_ref):
    # Fallback for weights too large to keep resident: K-innermost accumulate.
    @pl.when(pl.program_id(2) == 0)
    def _():
        acc_ref[...] = jnp.zeros_like(acc_ref)

    acc_ref[...] += jnp.dot(x_ref[...], w_ref[...],
                            preferred_element_type=jnp.float32)

    @pl.when(pl.program_id(2) == pl.num_programs(2) - 1)
    def _():
        o_ref[...] = (acc_ref[...] + b_ref[...]).astype(o_ref.dtype)


def dense_forward_resident(x_pad, w_pad, b_pad, *, tm, out_dtype):
    """y = x_pad @ w_pad + b_pad with the full weight slab resident in VMEM."""
    M, K = x_pad.shape
    K2, N = w_pad.shape
    assert K == K2 and b_pad.shape == (1, N)
    assert M % tm == 0

    flops = 2 * M * K * N
    bytes_accessed = (M * K * x_pad.dtype.itemsize        # x streamed once
                      + K * N * w_pad.dtype.itemsize      # W fetched once
                      + N * b_pad.dtype.itemsize          # bias fetched once
                      + M * N * jnp.dtype(out_dtype).itemsize)

    return pl.pallas_call(
        _dense_resident_kernel,
        out_shape=jax.ShapeDtypeStruct((M, N), out_dtype),
        grid_spec=pltpu.PrefetchScalarGridSpec(
            num_scalar_prefetch=0,
            grid=(M // tm,),
            in_specs=[
                pl.BlockSpec((tm, K), lambda i: (i, 0)),
                pl.BlockSpec((K, N), lambda i: (0, 0)),   # resident weights
                pl.BlockSpec((1, N), lambda i: (0, 0)),   # resident bias
            ],
            out_specs=pl.BlockSpec((tm, N), lambda i: (i, 0)),
        ),
        compiler_params=pltpu.CompilerParams(
            # M tiles are independent -> shard across the 2 TCs on v7x.
            dimension_semantics=("parallel",),
            vmem_limit_bytes=_VMEM_LIMIT,
        ),
        cost_estimate=pl.CostEstimate(
            flops=flops, transcendentals=0, bytes_accessed=bytes_accessed),
    )(x_pad, w_pad, b_pad)


def dense_forward_tiled(x_pad, w_pad, b_pad, *, tm, tn, tk, out_dtype):
    """General (M,N,K)-tiled fallback for weights too big for VMEM residency."""
    M, K = x_pad.shape
    _, N = w_pad.shape
    assert M % tm == 0 and N % tn == 0 and K % tk == 0
    grid = (M // tm, N // tn, K // tk)

    flops = 2 * M * K * N
    # Account for actual per-tile re-streaming (x per N-tile, W per M-tile).
    bytes_accessed = (M * K * x_pad.dtype.itemsize * (N // tn)
                      + K * N * w_pad.dtype.itemsize * (M // tm)
                      + N * b_pad.dtype.itemsize * (M // tm)
                      + M * N * jnp.dtype(out_dtype).itemsize)

    return pl.pallas_call(
        _dense_acc_kernel,
        out_shape=jax.ShapeDtypeStruct((M, N), out_dtype),
        grid_spec=pltpu.PrefetchScalarGridSpec(
            num_scalar_prefetch=0,
            grid=grid,
            in_specs=[
                pl.BlockSpec((tm, tk), lambda i, j, k: (i, k)),
                pl.BlockSpec((tk, tn), lambda i, j, k: (k, j)),
                pl.BlockSpec((1, tn), lambda i, j, k: (0, j)),
            ],
            out_specs=pl.BlockSpec((tm, tn), lambda i, j, k: (i, j)),
            scratch_shapes=[pltpu.VMEM((tm, tn), jnp.float32)],
        ),
        compiler_params=pltpu.CompilerParams(
            dimension_semantics=("parallel", "parallel", "arbitrary"),
            vmem_limit_bytes=_VMEM_LIMIT,
        ),
        cost_estimate=pl.CostEstimate(
            flops=flops, transcendentals=0, bytes_accessed=bytes_accessed),
    )(x_pad, w_pad, b_pad)


# ---------------------------------------------------------------------------
# One jitted function for the whole stage -> pad -> kernel -> slice path.
# Static args (bucketed m_pad, tiles, dtype, row split) keep the cache small.
# ---------------------------------------------------------------------------
@functools.partial(
    jax.jit,
    static_argnames=("in_features", "out_features", "m_pad", "tm", "tn", "tk",
                     "resident", "out_dtype_name", "row_counts"))
def _staged_forward(w_pad, b_pad, inputs, *, in_features, out_features,
                    m_pad, tm, tn, tk, resident, out_dtype_name, row_counts):
    out_dtype = jnp.dtype(out_dtype_name)
    k_pad = w_pad.shape[0]

    # Input staging: cast each input to the network buffer dtype (bf16 MXU
    # feed, analogous to `input.to(bmodel_in.dtype)`) and flatten so all
    # inputs share a single kernel launch.
    staged = [jnp.asarray(x).reshape(-1, in_features).astype(w_pad.dtype)
              for x in inputs]
    x_all = jnp.concatenate(staged, axis=0) if len(staged) > 1 else staged[0]
    rows = x_all.shape[0]

    # Lane/sublane-dense zero padding (rows -> bucketed multiple of 16,
    # K -> multiple of 128); zero rows/cols contribute nothing to x@W+b.
    x_padded = (jnp.zeros((m_pad, k_pad), w_pad.dtype)
                .at[:rows, :in_features].set(x_all))

    if resident:
        y_padded = dense_forward_resident(x_padded, w_pad, b_pad,
                                          tm=tm, out_dtype=out_dtype)
    else:
        y_padded = dense_forward_tiled(x_padded, w_pad, b_pad,
                                       tm=tm, tn=tn, tk=tk, out_dtype=out_dtype)

    y_all = y_padded[:rows, :out_features]

    # Split the slab back into one raw output per network input (static split).
    outs = []
    start = 0
    for rc in row_counts:
        outs.append(y_all[start:start + rc])
        start += rc
    return tuple(outs)


# ---------------------------------------------------------------------------
# Torch-dtype plumbing mirroring the original module.
# ---------------------------------------------------------------------------
def get_np_type_from_torch_type2(type_str):
    if type_str == "float16":
        return np.float16
    elif type_str == "float32":
        return np.float32
    elif type_str == "bool":
        return np.bool_
    else:
        return np.float32


def _cast_output_like_torch(out, dtype_str):
    # Mirrors: int64 -> .int() (truncating cast), float16 -> .half(),
    # everything else (incl. bool) -> .float(), as in the original forward().
    if dtype_str == "int64":
        return out.astype(jnp.int32)
    elif dtype_str == "float16":
        return out.astype(jnp.float16)
    else:
        return out.astype(jnp.float32)


# ---------------------------------------------------------------------------
# JAX re-implementation of TpuMlirModule.
# ---------------------------------------------------------------------------
class TpuMlirModuleJax:
    # Row-padding buckets so varying batch sizes reuse compiled signatures.
    _ROW_BUCKETS = (16, 32, 64, 128, 256, 512)

    def __init__(self, output_count, output_dtypes=None, output_shapes=(),
                 in_features=32, out_features=32):
        # Scalar output shapes [] are promoted to [1] like the original.
        output_shapes = [[1] if list(s) == [] else list(s) for s in output_shapes]
        self.output_count = output_count
        self.output_dtypes = output_dtypes
        self.output_shapes = output_shapes
        self.in_features = in_features
        self.out_features = out_features

        # Lane-dense padded network dims.
        self.k_pad = _round_up(in_features, 128)
        self.n_pad = _round_up(out_features, 128)

        # Resident-weight fast path when the bf16 weight slab is small enough
        # to sit in VMEM for the whole launch.
        self.resident = (self.k_pad * self.n_pad * 2) <= 8 * 1024 * 1024
        if self.resident:
            self.tk = self.k_pad
            self.tn = self.n_pad
        else:
            self.tk = _pick_tile(self.k_pad, 1024)
            self.tn = _pick_tile(self.n_pad, 512)

        # Deterministic synthetic "compiled network" parameters (stand-in for
        # the opaque bmodel weights), stored once, pre-padded, bf16 for MXU.
        key = jax.random.PRNGKey(0)
        kw, kb = jax.random.split(key)
        w = jax.random.normal(kw, (in_features, out_features), jnp.float32) * 0.1
        b = jax.random.normal(kb, (out_features,), jnp.float32) * 0.01
        self.w_padded = (jnp.zeros((self.k_pad, self.n_pad), jnp.bfloat16)
                         .at[:in_features, :out_features]
                         .set(w.astype(jnp.bfloat16)))
        self.b_padded = (jnp.zeros((1, self.n_pad), jnp.float32)
                         .at[0, :out_features].set(b))
        self.w = w
        self.b = b
        self.net_input_dtype = jnp.bfloat16
        self.initialized = True

    def _check_initialized(self):
        if not self.initialized:
            raise RuntimeError("TpuMlirModuleJax is not initialized.")

    def _fused_out_dtype(self):
        # Fuse the output cast into the kernel epilogue when every declared
        # output shares a float dtype; int64 (-> int32 truncation) stays in
        # the wrapper to preserve torch .int() semantics.
        if self.output_dtypes is None:
            return "float32"
        declared = set(self.output_dtypes[:self.output_count])
        if declared == {"float16"}:
            return "float16"
        return "float32"

    @classmethod
    def _bucket_rows(cls, rows):
        for b in cls._ROW_BUCKETS:
            if rows <= b:
                return b
        return _round_up(rows, 256)

    @staticmethod
    def _pick_tm(m_pad):
        # tm is always a multiple of 16 -> full bf16 [16,128] vregs.
        if m_pad >= 512:
            return 256          # >=2 parallel M tiles for v7x megacore
        if m_pad >= 64:
            return m_pad // 2   # 2 parallel M tiles when rows permit
        return m_pad            # tiny case: one tile, no extra grid steps

    def forward(self, *inputs):
        self._check_initialized()
        # TODO(synk): scalar_tensor_new_fx_graph side-channel (re-running fx
        # subgraphs on scalar inputs) and the bmodel engine state_dict
        # serialization have no Pallas equivalent and are omitted.
        if len(inputs) == 0:
            raise ValueError("forward() requires at least one input")

        row_counts = tuple(int(np.prod(np.shape(x))) // self.in_features
                           for x in inputs)
        rows = sum(row_counts)
        m_pad = self._bucket_rows(rows)
        tm = self._pick_tm(m_pad)

        raw_outputs = _staged_forward(
            self.w_padded, self.b_padded, tuple(inputs),
            in_features=self.in_features, out_features=self.out_features,
            m_pad=m_pad, tm=tm, tn=self.tn, tk=self.tk,
            resident=self.resident, out_dtype_name=self._fused_out_dtype(),
            row_counts=row_counts)

        if self.output_count > len(raw_outputs):
            raise ValueError(
                f"output_count={self.output_count} exceeds the number of "
                f"network outputs ({len(raw_outputs)})")

        # Output post-processing: reshape to declared shapes, then dtype cast.
        tpu_outputs = []
        for i in range(self.output_count):
            shape = self.output_shapes[i]
            if int(np.prod(shape)) != int(raw_outputs[i].size):
                raise ValueError(
                    f"output_shapes[{i}]={shape} does not match network output "
                    f"element count {raw_outputs[i].size}")
            out = raw_outputs[i].reshape(*shape)
            if out.shape == (1,):
                out = out[0]
            if self.output_dtypes is not None:
                out = _cast_output_like_torch(out, self.output_dtypes[i])
            tpu_outputs.append(out)

        if len(tpu_outputs) == 1:
            return tpu_outputs[0]
        return tpu_outputs

    __call__ = forward


if __name__ == "__main__":
    # Small shapes consistent with the wrapper: batch=2, hidden=32.
    B, H_IN, H_OUT = 2, 32, 32
    key = jax.random.PRNGKey(0)
    k0, k1, k2 = jax.random.split(key, 3)
    x0 = jax.random.normal(k0, (B, H_IN), jnp.float32)
    x1 = jax.random.normal(k1, (B, H_IN), jnp.float32)

    module = TpuMlirModuleJax(
        output_count=2,
        output_dtypes=["float32", "float32"],
        output_shapes=[[B, H_OUT], [B, H_OUT]],
        in_features=H_IN,
        out_features=H_OUT,
    )

    # Both inputs are processed in a single pallas_call launch.
    outs = jax.block_until_ready(module(x0, x1))

    # Reference uses the same bf16-rounded operands with f32 accumulation.
    w_f32 = module.w_padded[:H_IN, :H_OUT].astype(jnp.float32)
    for x, out in zip((x0, x1), outs):
        x_f32 = x.astype(jnp.bfloat16).astype(jnp.float32)
        ref = x_f32 @ w_f32 + module.b
        np.testing.assert_allclose(np.asarray(out), np.asarray(ref),
                                   rtol=1e-4, atol=1e-5)
        assert out.shape == (B, H_OUT) and out.dtype == jnp.float32

    # Single-output unwrap rule + a larger batch exercising the bucketed
    # row padding and the multi-tile (parallel) M grid.
    B2 = 80
    x2 = jax.random.normal(k2, (B2, H_IN), jnp.float32)
    single_module = TpuMlirModuleJax(
        output_count=1,
        output_dtypes=["float32"],
        output_shapes=[[B2, H_OUT]],
        in_features=H_IN,
        out_features=H_OUT,
    )
    single_out = jax.block_until_ready(single_module(x2))
    ref2 = x2.astype(jnp.bfloat16).astype(jnp.float32) @ w_f32 + single_module.b
    np.testing.assert_allclose(np.asarray(single_out), np.asarray(ref2),
                               rtol=1e-4, atol=1e-5)
    assert single_out.shape == (B2, H_OUT) and single_out.dtype == jnp.float32

    print("KERNEL_OK")
</pallas_src>

<mosaic_0001>
module attributes {stable_mosaic.version = 11 : i64} {
  func.func @_dense_resident_kernel(%arg0: i32, %arg1: memref<16x128xbf16, #tpu.memory_space<vmem>>, %arg2: memref<128x128xbf16, #tpu.memory_space<vmem>>, %arg3: memref<1x128xf32, #tpu.memory_space<vmem>>, %arg4: memref<16x128xf32, #tpu.memory_space<vmem>>) attributes {dimension_semantics = [#tpu.dimension_semantics<parallel>], iteration_bounds = array<i64: 1>, scalar_prefetch = 0 : i64, scratch_operands = 0 : i64, tpu.core_type = #tpu.core_type<tc>, window_params = [{transform_indices = @transform_0, window_bounds = array<i64: 16, 128>}, {pipeline_mode = #tpu.pipeline_mode<synchronous>, transform_indices = @transform_1, window_bounds = array<i64: 128, 128>}, {pipeline_mode = #tpu.pipeline_mode<synchronous>, transform_indices = @transform_2, window_bounds = array<i64: 1, 128>}, {transform_indices = @transform_3, window_bounds = array<i64: 16, 128>}]} {
    %c0 = arith.constant 0 : index
    %c0_0 = arith.constant 0 : index
    %0 = vector.load %arg1[%c0, %c0_0] : memref<16x128xbf16, #tpu.memory_space<vmem>>, vector<16x128xbf16>
    %c0_1 = arith.constant 0 : index
    %c0_2 = arith.constant 0 : index
    %1 = vector.load %arg2[%c0_1, %c0_2] : memref<128x128xbf16, #tpu.memory_space<vmem>>, vector<128x128xbf16>
    %cst = arith.constant dense<0.000000e+00> : vector<16x128xf32>
    %2 = tpu.matmul %0, %1, %cst {dimension_numbers = #tpu.dot_dimension_numbers<[1], [0], [0], [1], [0, 0, 1, 1], [], []>} : vector<16x128xbf16>, vector<128x128xbf16>, vector<16x128xf32> -> vector<16x128xf32>
    %c0_3 = arith.constant 0 : index
    %c0_4 = arith.constant 0 : index
    %3 = vector.load %arg3[%c0_3, %c0_4] : memref<1x128xf32, #tpu.memory_space<vmem>>, vector<1x128xf32>
    %4 = vector.broadcast %3 : vector<1x128xf32> to vector<16x128xf32>
    %5 = arith.addf %2, %4 : vector<16x128xf32>
    %c0_5 = arith.constant 0 : index
    %c0_6 = arith.constant 0 : index
    %6 = vector.load %arg4[%c0_5, %c0_6] : memref<16x128xf32, #tpu.memory_space<vmem>>, vector<16x128xf32>
    tpu.vector_store %arg4[%c0_5, %c0_6], %5 {strides = array<i32>} : memref<16x128xf32, #tpu.memory_space<vmem>>, vector<16x128xf32>,
    return
  }
  func.func @transform_0(%arg0: i32) -> (i32, i32) {
    %c0_i32 = arith.constant 0 : i32
    %c0_i32_0 = arith.constant 0 : i32
    return %arg0, %c0_i32 : i32, i32
  }
  func.func @transform_1(%arg0: i32) -> (i32, i32) {
    %c0_i32 = arith.constant 0 : i32
    %c0_i32_0 = arith.constant 0 : i32
    %c0_i32_1 = arith.constant 0 : i32
    return %c0_i32, %c0_i32_0 : i32, i32
  }
  func.func @transform_2(%arg0: i32) -> (i32, i32) {
    %c0_i32 = arith.constant 0 : i32
    %c0_i32_0 = arith.constant 0 : i32
    %c0_i32_1 = arith.constant 0 : i32
    return %c0_i32, %c0_i32_0 : i32, i32
  }
  func.func @transform_3(%arg0: i32) -> (i32, i32) {
    %c0_i32 = arith.constant 0 : i32
    %c0_i32_0 = arith.constant 0 : i32
    return %arg0, %c0_i32 : i32, i32
  }
}

</mosaic_0001>

<llo_original>
// kernel: _staged_forward.1
$region0: #{_staged_forward.1}
  #allocation0 [shape = 'u32[]', space=smem, size = 0x4, offset = 0x4, fixed_abs, tag = 'smem constant byte address 0x4 - core index']
  #allocation1 [shape = 'u32[72,128]{1,0:T(1,128)}', space=vmem, size = 0x9000, scoped, tag = 'internal scratch']
  %s0 = inlined_call_operand.vmem [shape: bf16[16,128], index: 0, kind: input, shape index: {}]
  %s1 = inlined_call_operand.hbm [shape: bf16[128,128], index: 1, kind: input, shape index: {}]
  %s2 = inlined_call_operand.vmem [shape: f32[1,128], index: 2, kind: input, shape index: {}]
  %s3 = inlined_call_operand.vmem [shape: f32[16,128], index: 3, kind: output, shape index: {}]
  %s4 = sld [smem:[#allocation0]]
  $region26: #{_staged_forward.1} parent=0
    _
  %s6 = ssub.s32 1, %s4
  %s7 = scalar_select 0, %s6, %s4
  $region1: #{_staged_forward.1} parent=0
    #allocation2 [shape = 'u8[32768]{0}', space=vmem, size = 0x8000, scoped, tag = 'input window, operand 1, single buffered']
    #allocation3 [shape = 's32[1]{0}', space=sflag, size = 0x4, scoped, tag = 'scoped memory for _staged_forward.1']
    %8 = vsyncpa [#allocation3], 0
    // Predicated region
    $region2: #{_staged_forward.1} parent=1 // pred_check
      _
    $region3: #{_staged_forward.1} parent=1 // pred_check_branch
      %10 = sbr.rel (0) target = $region5
    $region4: #{_staged_forward.1} parent=1 // pred_region
      _
    $region5: #{_staged_forward.1} parent=1 // pred_fallthru
      _
    // Predicated region
    $region6: #{_staged_forward.1} parent=1 // pred_check
      _
    $region7: #{_staged_forward.1} parent=1 // pred_check_branch
      %12 = sbr.rel (0) target = $region9
    $region8: #{_staged_forward.1} parent=1 // pred_region
      %14 = vsyncadd [#allocation3], 0
      %s15 = sshll.u32 %s1, 4
      %s16 = int_to_ptr.hbm [resolvable:$true] %s15
      %s17 = sshll.u32 [#allocation2], 4
      %s18 = int_to_ptr.vmem [resolvable:$true] %s17
      %23 = dma.hbm_to_vmem [thread:$0]  %s16, 1024, %s18, [#allocation3], 64, 64, 4
    $region9: #{_staged_forward.1} parent=1 // pred_fallthru
      _
    // Predicated region
    $region10: #{_staged_forward.1} parent=1 // pred_check
      _
    $region11: #{_staged_forward.1} parent=1 // pred_check_branch
      %25 = sbr.rel (0) target = $region13
    $region12: #{_staged_forward.1} parent=1 // pred_region
      _
    $region13: #{_staged_forward.1} parent=1 // pred_fallthru
      _
    // Predicated region
    $region14: #{_staged_forward.1} parent=1 // pred_check
      _
    $region15: #{_staged_forward.1} parent=1 // pred_check_branch
      %27 = sbr.rel (0) target = $region17
    $region16: #{_staged_forward.1} parent=1 // pred_region
      %29 = dma.done [#allocation3], 1024
    $region17: #{_staged_forward.1} parent=1 // pred_fallthru
      _
    %v30 = vld [vmem:[%s0] sm:$0xf]
    %v31 = vld [vmem:[%s0 + $0x4] sm:$0xf]
    %v32 = vld [vmem:[#allocation2] sm:$0xf]
    %v33 = vld [vmem:[#allocation2 + $0x4] sm:$0xf]
    %v34 = vld [vmem:[#allocation2 + $0x8] sm:$0xf]
    %v35 = vld [vmem:[#allocation2 + $0xc] sm:$0xf]
    %v36 = vld [vmem:[#allocation2 + $0x10] sm:$0xf]
    %v37 = vld [vmem:[#allocation2 + $0x14] sm:$0xf]
    %v38 = vld [vmem:[#allocation2 + $0x18] sm:$0xf]
    %v39 = vld [vmem:[#allocation2 + $0x1c] sm:$0xf]
    %v40 = vld [vmem:[#allocation2 + $0x20] sm:$0xf]
    %v41 = vld [vmem:[#allocation2 + $0x24] sm:$0xf]
    %v42 = vld [vmem:[#allocation2 + $0x28] sm:$0xf]
    %v43 = vld [vmem:[#allocation2 + $0x2c] sm:$0xf]
    %v44 = vld [vmem:[#allocation2 + $0x30] sm:$0xf]
    %v45 = vld [vmem:[#allocation2 + $0x34] sm:$0xf]
    %v46 = vld [vmem:[#allocation2 + $0x38] sm:$0xf]
    %v47 = vld [vmem:[#allocation2 + $0x3c] sm:$0xf]
    %v48 = vld [vmem:[%s2] sm:$0x1]
    %v50 = vperm.slane %v48, 0
    %v54 = vunpack.c.l.b16 %v30
    %v55 = vunpack.c.l.b16 %v31
    %v56 = vpack.c.b16 %v55, %v54
    %v74 = vunpack.c.l.b16 %v32
    %v75 = vunpack.c.l.b16 %v33
    %v76 = vunpack.c.l.b16 %v34
    %v77 = vunpack.c.l.b16 %v35
    %v78 = vunpack.c.l.b16 %v36
    %v79 = vunpack.c.l.b16 %v37
    %v80 = vunpack.c.l.b16 %v38
    %v81 = vunpack.c.l.b16 %v39
    %v82 = vunpack.c.l.b16 %v40
    %v83 = vunpack.c.l.b16 %v41
    %v84 = vunpack.c.l.b16 %v42
    %v85 = vunpack.c.l.b16 %v43
    %v86 = vunpack.c.l.b16 %v44
    %v87 = vunpack.c.l.b16 %v45
    %v88 = vunpack.c.l.b16 %v46
    %v89 = vunpack.c.l.b16 %v47
    %v90 = vpack.c.b16 %v75, %v74
    %v91 = vpack.c.b16 %v77, %v76
    %v92 = vpack.c.b16 %v79, %v78
    %v93 = vpack.c.b16 %v81, %v80
    %v94 = vpack.c.b16 %v83, %v82
    %v95 = vpack.c.b16 %v85, %v84
    %v96 = vpack.c.b16 %v87, %v86
    %v97 = vpack.c.b16 %v89, %v88
    %106 = vmatpush.bf16.msra.mxu0 %v97
    %107 = vmatpush.bf16.msra.mxu0 %v96
    %108 = vmatpush.bf16.msra.mxu0 %v95
    %109 = vmatpush.bf16.msra.mxu0 %v94
    %110 = vmatpush.bf16.msra.mxu0 %v93
    %111 = vmatpush.bf16.msra.mxu0 %v92
    %112 = vmatpush.bf16.msra.mxu0 %v91
    %113 = vmatpush.bf16.msra.mxu0 %v90
    %114 = vmatmul.bf16.gmra.mxu0 %v56
    %v115 = vpop.f32.mrf.mxu0
    %v116 = vadd.f32 %v50, %v115
    %v117 = vpop.f32.mrf.mxu0
    %v118 = vadd.f32 %v50, %v117
    %119 = vdwg.mxu0
    %120 = vst [vmem:[%s3] sm:$0xff] %v116
    %121 = vst [vmem:[%s3 + $0x8] sm:$0xff] %v118
    // Predicated region
    $region18: #{_staged_forward.1} parent=1 // pred_check
      _
    $region19: #{_staged_forward.1} parent=1 // pred_check_branch
      %123 = sbr.rel (0) target = $region21
    $region20: #{_staged_forward.1} parent=1 // pred_region
      _
    $region21: #{_staged_forward.1} parent=1 // pred_fallthru
      _
    // Predicated region
    $region22: #{_staged_forward.1} parent=1 // pred_check
      _
    $region23: #{_staged_forward.1} parent=1 // pred_check_branch
      %125 = sbr.rel (0) target = $region25
    $region24: #{_staged_forward.1} parent=1 // pred_region
      _
    $region25: #{_staged_forward.1} parent=1 // pred_fallthru
      _
    %126 = vsyncpa [#allocation3], 1

</llo_original>
